<compile_context>
chip_gen: v7x
topology: tpu7x:2x2x1
jax: 0.10.0
libtpu: 0.0.40
codegen_flags: <defaults>
</compile_context>

<pallas_src>
import functools

import jax
import jax.numpy as jnp
from jax.experimental import pallas as pl
from jax.experimental.pallas import tpu as pltpu


def _triplet_loss_kernel(a_ref, p_ref, n_ref, out_ref, *, margin):
    # (TB, D) tiles; accumulate in f32 regardless of input dtype.
    a = a_ref[...].astype(jnp.float32)
    p = p_ref[...].astype(jnp.float32)
    n = n_ref[...].astype(jnp.float32)

    dp = a - p
    dn = a - n
    # Fused single cross-lane reduction:
    #   sum(dp^2 - dn^2, axis=1) == distance_positive - distance_negative
    s = jnp.sum(dp * dp - dn * dn, axis=1, keepdims=True)            # (TB, 1)

    # Per-row hinge loss; the (tiny) mean is finished in the wrapper.
    out_ref[...] = jnp.maximum(s + jnp.float32(margin), jnp.float32(0.0))


def _round_up(x, m):
    return ((x + m - 1) // m) * m


def triplet_loss(anchor, positive, negative, margin=1.0):
    """Pallas TPU implementation of TripletLoss.forward. Returns a scalar f32."""
    assert anchor.shape == positive.shape == negative.shape
    assert anchor.ndim == 2
    b, d = anchor.shape
    itemsize = jnp.dtype(anchor.dtype).itemsize

    # --- batch tile size: largest TB (multiple of 8) whose pipelined input
    # footprint (3 streams x 2 buffers x TB x D) fits a conservative budget
    # that is safe on v5e/v6e/v7x with the explicit vmem_limit below.
    vmem_input_budget = 24 * 1024 * 1024
    tb = vmem_input_budget // (3 * 2 * d * itemsize)
    tb = max(8, min(tb, 2048, _round_up(b, 8)))
    tb = (tb // 8) * 8

    num_tiles = pl.cdiv(b, tb)
    b_pad = num_tiles * tb
    if b_pad != b:
        pad = ((0, b_pad - b), (0, 0))
        anchor = jnp.pad(anchor, pad)
        positive = jnp.pad(positive, pad)
        negative = jnp.pad(negative, pad)

    kernel = functools.partial(_triplet_loss_kernel, margin=float(margin))

    per_row = pl.pallas_call(
        kernel,
        out_shape=jax.ShapeDtypeStruct((b_pad, 1), jnp.float32),
        grid=(num_tiles,),
        in_specs=[
            pl.BlockSpec((tb, d), lambda i: (i, 0)),
            pl.BlockSpec((tb, d), lambda i: (i, 0)),
            pl.BlockSpec((tb, d), lambda i: (i, 0)),
        ],
        out_specs=pl.BlockSpec((tb, 1), lambda i: (i, 0)),
        compiler_params=pltpu.CompilerParams(
            dimension_semantics=("parallel",),
            vmem_limit_bytes=32 * 1024 * 1024,
        ),
    )(anchor, positive, negative)

    # Tiny epilogue in plain JAX: drop padded rows, mean over the true batch.
    return jnp.sum(per_row[:b, 0]) / jnp.float32(b)


def _reference(anchor, positive, negative, margin=1.0):
    a = anchor.astype(jnp.float32)
    p = positive.astype(jnp.float32)
    n = negative.astype(jnp.float32)
    dp = jnp.sum((a - p) ** 2, axis=1)
    dn = jnp.sum((a - n) ** 2, axis=1)
    return jnp.mean(jnp.maximum(dp - dn + margin, 0.0))


if __name__ == "__main__":
    key = jax.random.PRNGKey(0)
    k1, k2, k3, k4 = jax.random.split(key, 4)

    # Case 1: small f32 (N, D) embeddings, as the module's .sum(1) implies.
    B, D = 8, 32
    a = jax.random.normal(k1, (B, D), dtype=jnp.float32)
    p = jax.random.normal(k2, (B, D), dtype=jnp.float32)
    n = jax.random.normal(k3, (B, D), dtype=jnp.float32)

    loss = jax.block_until_ready(triplet_loss(a, p, n, margin=1.0))
    ref = _reference(a, p, n, margin=1.0)
    assert jnp.allclose(loss, ref, rtol=1e-5, atol=1e-5), (loss, ref)

    # Case 2: batch not a multiple of the tile (exercises padding path),
    # lane-dense D=128, bf16 inputs read directly (f32 accumulation in-kernel).
    B2, D2 = 37, 128
    k5, k6, k7 = jax.random.split(k4, 3)
    a2 = jax.random.normal(k5, (B2, D2), dtype=jnp.float32).astype(jnp.bfloat16)
    p2 = jax.random.normal(k6, (B2, D2), dtype=jnp.float32).astype(jnp.bfloat16)
    n2 = jax.random.normal(k7, (B2, D2), dtype=jnp.float32).astype(jnp.bfloat16)

    loss2 = jax.block_until_ready(triplet_loss(a2, p2, n2, margin=1.0))
    ref2 = _reference(a2, p2, n2, margin=1.0)
    assert jnp.allclose(loss2, ref2, rtol=2e-2, atol=2e-2), (loss2, ref2)

    print("KERNEL_OK")
</pallas_src>

<mosaic_0001>
module attributes {stable_mosaic.version = 11 : i64} {
  func.func @_triplet_loss_kernel(%arg0: i32, %arg1: memref<8x32xf32, #tpu.memory_space<vmem>>, %arg2: memref<8x32xf32, #tpu.memory_space<vmem>>, %arg3: memref<8x32xf32, #tpu.memory_space<vmem>>, %arg4: memref<8x1xf32, #tpu.memory_space<vmem>>) attributes {dimension_semantics = [#tpu.dimension_semantics<parallel>], iteration_bounds = array<i64: 1>, scalar_prefetch = 0 : i64, scratch_operands = 0 : i64, tpu.core_type = #tpu.core_type<tc>, window_params = [{transform_indices = @transform_0, window_bounds = array<i64: 8, 32>}, {transform_indices = @transform_1, window_bounds = array<i64: 8, 32>}, {transform_indices = @transform_2, window_bounds = array<i64: 8, 32>}, {transform_indices = @transform_3, window_bounds = array<i64: 8, 1>}]} {
    %c0 = arith.constant 0 : index
    %c0_0 = arith.constant 0 : index
    %0 = vector.load %arg1[%c0, %c0_0] : memref<8x32xf32, #tpu.memory_space<vmem>>, vector<8x32xf32>
    %c0_1 = arith.constant 0 : index
    %c0_2 = arith.constant 0 : index
    %1 = vector.load %arg2[%c0_1, %c0_2] : memref<8x32xf32, #tpu.memory_space<vmem>>, vector<8x32xf32>
    %c0_3 = arith.constant 0 : index
    %c0_4 = arith.constant 0 : index
    %2 = vector.load %arg3[%c0_3, %c0_4] : memref<8x32xf32, #tpu.memory_space<vmem>>, vector<8x32xf32>
    %3 = arith.subf %0, %1 : vector<8x32xf32>
    %4 = arith.subf %0, %2 : vector<8x32xf32>
    %5 = arith.mulf %3, %3 : vector<8x32xf32>
    %6 = arith.mulf %4, %4 : vector<8x32xf32>
    %7 = arith.subf %5, %6 : vector<8x32xf32>
    %cst = arith.constant dense<0.000000e+00> : vector<8xf32>
    %8 = vector.multi_reduction <add>, %7, %cst [1] : vector<8x32xf32> to vector<8xf32>
    %9 = vector.shape_cast %8 : vector<8xf32> to vector<8x1xf32>
    %cst_5 = arith.constant 1.000000e+00 : f32
    %10 = vector.broadcast %cst_5 : f32 to vector<8x1xf32>
    %11 = arith.addf %9, %10 : vector<8x1xf32>
    %cst_6 = arith.constant 0.000000e+00 : f32
    %12 = vector.broadcast %cst_6 : f32 to vector<8x1xf32>
    %13 = arith.maximumf %11, %12 : vector<8x1xf32>
    %c0_7 = arith.constant 0 : index
    %c0_8 = arith.constant 0 : index
    %14 = vector.load %arg4[%c0_7, %c0_8] : memref<8x1xf32, #tpu.memory_space<vmem>>, vector<8x1xf32>
    tpu.vector_store %arg4[%c0_7, %c0_8], %13 {strides = array<i32>} : memref<8x1xf32, #tpu.memory_space<vmem>>, vector<8x1xf32>,
    return
  }
  func.func @transform_0(%arg0: i32) -> (i32, i32) {
    %c0_i32 = arith.constant 0 : i32
    %c0_i32_0 = arith.constant 0 : i32
    return %arg0, %c0_i32 : i32, i32
  }
  func.func @transform_1(%arg0: i32) -> (i32, i32) {
    %c0_i32 = arith.constant 0 : i32
    %c0_i32_0 = arith.constant 0 : i32
    return %arg0, %c0_i32 : i32, i32
  }
  func.func @transform_2(%arg0: i32) -> (i32, i32) {
    %c0_i32 = arith.constant 0 : i32
    %c0_i32_0 = arith.constant 0 : i32
    return %arg0, %c0_i32 : i32, i32
  }
  func.func @transform_3(%arg0: i32) -> (i32, i32) {
    %c0_i32 = arith.constant 0 : i32
    %c0_i32_0 = arith.constant 0 : i32
    return %arg0, %c0_i32 : i32, i32
  }
}

</mosaic_0001>

<llo_original>
// kernel: tpu_custom_call.1
$region0: #{tpu_custom_call.1}
  #allocation0 [shape = 'u32[]', space=smem, size = 0x4, offset = 0x4, fixed_abs, tag = 'smem constant byte address 0x4 - core index']
  #allocation1 [shape = 'u32[144,128]{1,0:T(1,128)}', space=vmem, size = 0x12000, scoped, tag = 'internal scratch']
  %s0 = inlined_call_operand.hbm [shape: f32[8,32], index: 0, kind: input, shape index: {}]
  %s1 = inlined_call_operand.hbm [shape: f32[8,32], index: 1, kind: input, shape index: {}]
  %s2 = inlined_call_operand.hbm [shape: f32[8,32], index: 2, kind: input, shape index: {}]
  %s3 = inlined_call_operand.vmem [shape: f32[8,1], index: 3, kind: output, shape index: {}]
  %s4 = sld [smem:[#allocation0]]
  $region34: #{tpu_custom_call.1} parent=0
    _
  %s6 = ssub.s32 1, %s4
  %s7 = scalar_select 0, %s6, %s4
  $region1: #{tpu_custom_call.1} parent=0
    #allocation2 [shape = 'u8[4096]{0}', space=vmem, size = 0x1000, scoped, tag = 'input window, operand 0, single buffered']
    #allocation3 [shape = 's32[1]{0}', space=sflag, size = 0x4, scoped, tag = 'scoped memory for tpu_custom_call.1']
    #allocation4 [shape = 'u8[4096]{0}', space=vmem, size = 0x1000, scoped, tag = 'input window, operand 1, single buffered']
    #allocation5 [shape = 's32[1]{0}', space=sflag, size = 0x4, scoped, tag = 'scoped memory for tpu_custom_call.1']
    #allocation6 [shape = 'u8[4096]{0}', space=vmem, size = 0x1000, scoped, tag = 'input window, operand 2, single buffered']
    %8 = vsyncpa [#allocation3], 0
    %9 = vsyncpa [#allocation5], 0
    // Predicated region
    $region2: #{tpu_custom_call.1} parent=1 // pred_check
      _
    $region3: #{tpu_custom_call.1} parent=1 // pred_check_branch
      %11 = sbr.rel (0) target = $region5
    $region4: #{tpu_custom_call.1} parent=1 // pred_region
      %s13 = ssub.s32 128, 128
      %14 = vsyncadd [#allocation3], %s13
      %s16 = sshll.u32 [#allocation2], 4
      %s17 = int_to_ptr.vmem [resolvable:$true] %s16
      %19 = dma.hbm_to_vmem [thread:$0]  %s0, 128, %s17, [#allocation3]
    $region5: #{tpu_custom_call.1} parent=1 // pred_fallthru
      _
    // Predicated region
    $region6: #{tpu_custom_call.1} parent=1 // pred_check
      _
    $region7: #{tpu_custom_call.1} parent=1 // pred_check_branch
      %21 = sbr.rel (0) target = $region9
    $region8: #{tpu_custom_call.1} parent=1 // pred_region
      %s23 = ssub.s32 128, 128
      %24 = vsyncadd [#allocation5], %s23
      %s26 = sshll.u32 [#allocation4], 4
      %s27 = int_to_ptr.vmem [resolvable:$true] %s26
      %29 = dma.hbm_to_vmem [thread:$0]  %s1, 128, %s27, [#allocation5]
    $region9: #{tpu_custom_call.1} parent=1 // pred_fallthru
      _
    // Predicated region
    $region10: #{tpu_custom_call.1} parent=1 // pred_check
      _
    $region11: #{tpu_custom_call.1} parent=1 // pred_check_branch
      %31 = sbr.rel (0) target = $region13
    $region12: #{tpu_custom_call.1} parent=1 // pred_region
      %s33 = ssub.s32 128, 128
      %34 = vsyncadd [#allocation5], %s33
      %s36 = sshll.u32 [#allocation6], 4
      %s37 = int_to_ptr.vmem [resolvable:$true] %s36
      %39 = dma.hbm_to_vmem [thread:$0]  %s2, 128, %s37, [#allocation5]
    $region13: #{tpu_custom_call.1} parent=1 // pred_fallthru
      _
    // Predicated region
    $region14: #{tpu_custom_call.1} parent=1 // pred_check
      _
    $region15: #{tpu_custom_call.1} parent=1 // pred_check_branch
      %41 = sbr.rel (0) target = $region17
    $region16: #{tpu_custom_call.1} parent=1 // pred_region
      %42 = dma.done [#allocation3], 128
    $region17: #{tpu_custom_call.1} parent=1 // pred_fallthru
      _
    // Predicated region
    $region18: #{tpu_custom_call.1} parent=1 // pred_check
      _
    $region19: #{tpu_custom_call.1} parent=1 // pred_check_branch
      %44 = sbr.rel (0) target = $region21
    $region20: #{tpu_custom_call.1} parent=1 // pred_region
      %45 = dma.done [#allocation5], 128
    $region21: #{tpu_custom_call.1} parent=1 // pred_fallthru
      _
    // Predicated region
    $region22: #{tpu_custom_call.1} parent=1 // pred_check
      _
    $region23: #{tpu_custom_call.1} parent=1 // pred_check_branch
      %47 = sbr.rel (0) target = $region25
    $region24: #{tpu_custom_call.1} parent=1 // pred_region
      %48 = dma.done [#allocation5], 128
    $region25: #{tpu_custom_call.1} parent=1 // pred_fallthru
      _
    %v49 = vld [vmem:[#allocation2] sm:$0xff]
    %v50 = vld [vmem:[#allocation4] sm:$0xff]
    %v51 = vld [vmem:[#allocation6] sm:$0xff]
    %v52 = vsub.f32 %v49, %v50
    %v53 = vsub.f32 %v49, %v51
    %v54 = vmul.f32 %v52, %v52
    %v55 = vmul.f32 %v53, %v53
    %v56 = vsub.f32 %v54, %v55
    %vm57 = vcmask 261120
    %v58 = vsel %vm57, %v56, 0.0
    %59 = vadd.xlane.f32.xlu0 %v58
    %v60 = vpop.xlane.xlu0 %59
    %v61 = vadd.f32 %v60, 1.0
    %v62 = vmax.f32 %v61, 0.0
    %vm63 = vcmask 7168
    %64 = vst.msk [vmem:[%s3] sm:$0xff] %vm63, %v62
    // Predicated region
    $region26: #{tpu_custom_call.1} parent=1 // pred_check
      _
    $region27: #{tpu_custom_call.1} parent=1 // pred_check_branch
      %66 = sbr.rel (0) target = $region29
    $region28: #{tpu_custom_call.1} parent=1 // pred_region
      _
    $region29: #{tpu_custom_call.1} parent=1 // pred_fallthru
      _
    // Predicated region
    $region30: #{tpu_custom_call.1} parent=1 // pred_check
      _
    $region31: #{tpu_custom_call.1} parent=1 // pred_check_branch
      %68 = sbr.rel (0) target = $region33
    $region32: #{tpu_custom_call.1} parent=1 // pred_region
      _
    $region33: #{tpu_custom_call.1} parent=1 // pred_fallthru
      _
    %69 = vsyncpa [#allocation3], 1
    %70 = vsyncpa [#allocation5], 1

</llo_original>
